<compile_context>
chip_gen: v7x
topology: tpu7x:2x2x1
jax: 0.10.0
libtpu: 0.0.40
codegen_flags: <defaults>
</compile_context>

<pallas_src>
import math
import functools

import jax
import jax.numpy as jnp
from jax.experimental import pallas as pl
from jax.experimental.pallas import tpu as pltpu

LN_EPS = 1e-12  # BERT LayerNorm eps

# Conservative tile targets that fit comfortably inside the 64 MiB v7x VMEM
# budget (double-buffered bf16 blocks + f32 accumulator ~ a few MiB); v5e/v6e
# have more headroom so these are safe everywhere.
_TM, _TN, _TK = 512, 512, 512


def _pick_tile(dim, target):
    """Largest divisor of `dim` that is <= target (dim itself if dim <= target)."""
    if dim <= target:
        return dim
    for t in range(target, 0, -1):
        if dim % t == 0:
            return t
    return dim


# ----------------------------- Pallas kernels ------------------------------ #

def _matmul_bias_kernel(x_ref, w_ref, b_ref, o_ref, acc_ref, *, activation):
    # grid = (M/tm, N/tn, K/tk); K is last + arbitrary.
    @pl.when(pl.program_id(2) == 0)
    def _():
        acc_ref[...] = jnp.zeros_like(acc_ref)

    acc_ref[...] += jnp.dot(x_ref[...], w_ref[...],
                            preferred_element_type=jnp.float32)

    @pl.when(pl.program_id(2) == pl.num_programs(2) - 1)
    def _():
        y = acc_ref[...] + b_ref[...]
        if activation == "gelu":        # erf-based GELU as in BERT
            y = 0.5 * y * (1.0 + jax.lax.erf(y * 0.7071067811865476))
        o_ref[...] = y.astype(o_ref.dtype)


def _matmul_bias_add_ln_kernel(x_ref, w_ref, b_ref, res_ref, g_ref, bb_ref,
                               o_ref, acc_ref):
    # grid = (M/tm, K/tk); full N per block so LayerNorm can run in the epilogue.
    @pl.when(pl.program_id(1) == 0)
    def _():
        acc_ref[...] = jnp.zeros_like(acc_ref)

    acc_ref[...] += jnp.dot(x_ref[...], w_ref[...],
                            preferred_element_type=jnp.float32)

    @pl.when(pl.program_id(1) == pl.num_programs(1) - 1)
    def _():
        h = acc_ref[...] + b_ref[...] + res_ref[...].astype(jnp.float32)
        mu = jnp.mean(h, axis=-1, keepdims=True)
        var = jnp.mean(jnp.square(h - mu), axis=-1, keepdims=True)
        y = (h - mu) * jax.lax.rsqrt(var + LN_EPS)
        o_ref[...] = (y * g_ref[...] + bb_ref[...]).astype(o_ref.dtype)


def _emb_add_ln_kernel(w_ref, p_ref, t_ref, g_ref, b_ref, o_ref):
    # Fused embedding sum (word + position + token_type) + LayerNorm.
    # f32 math, bf16 out; avoids materializing the f32 embedding slab in HBM.
    h = (w_ref[0].astype(jnp.float32)
         + p_ref[...].astype(jnp.float32)
         + t_ref[...].astype(jnp.float32))
    mu = jnp.mean(h, axis=-1, keepdims=True)
    var = jnp.mean(jnp.square(h - mu), axis=-1, keepdims=True)
    y = (h - mu) * jax.lax.rsqrt(var + LN_EPS)
    o_ref[0] = (y * g_ref[...] + b_ref[...]).astype(o_ref.dtype)


def _attn_kernel(qkv_ref, mask_ref, o_ref, *, heads, scale):
    # One batch element: all heads processed inside; lane-dense (S, H) output.
    # qkv slab is read from HBM exactly once per batch element.
    qkv = qkv_ref[0]                 # (S, 3H) bf16
    m = mask_ref[0]                  # (1, S)  additive mask (0 / -10000)
    S, H3 = qkv.shape
    H = H3 // 3
    Dh = H // heads

    ctx_parts = []
    for h in range(heads):           # static unrolled loop over heads
        qh = qkv[:, h * Dh:(h + 1) * Dh]                   # (S, Dh)
        kh = qkv[:, H + h * Dh:H + (h + 1) * Dh]           # (S, Dh)
        vh = qkv[:, 2 * H + h * Dh:2 * H + (h + 1) * Dh]   # (S, Dh)

        # contract last axes of both operands -> MXU consumes K in native layout
        s = jax.lax.dot_general(qh, kh, (((1,), (1,)), ((), ())),
                                preferred_element_type=jnp.float32)
        s = s * scale + m                                  # broadcast (1,S)->(S,S)
        s_max = jnp.max(s, axis=-1, keepdims=True)
        e = jnp.exp(s - s_max)
        denom = jnp.sum(e, axis=-1, keepdims=True)
        p = e * pl.reciprocal(denom, approx=True)          # EUP, not VPU divide
        ctx = jnp.dot(p.astype(jnp.bfloat16), vh,
                      preferred_element_type=jnp.float32)   # (S, Dh)
        ctx_parts.append(ctx)

    # single lane-dense store of the whole (S, H) context slab
    o_ref[0] = jnp.concatenate(ctx_parts, axis=-1).astype(o_ref.dtype)


# ------------------------------ Pallas wrappers ----------------------------- #

def dense(x2d, w, b, activation=None):
    """y = act(x @ w + b); bf16 in/out, f32 accumulation; tiled over M/N/K."""
    M, K = x2d.shape
    _, N = w.shape
    tm, tn, tk = _pick_tile(M, _TM), _pick_tile(N, _TN), _pick_tile(K, _TK)
    kern = functools.partial(_matmul_bias_kernel, activation=activation)
    ce = pl.CostEstimate(
        flops=2 * M * N * K,
        transcendentals=(M * N if activation == "gelu" else 0),
        bytes_accessed=2 * (M * K + K * N + M * N) + 4 * N)
    return pl.pallas_call(
        kern,
        grid=(M // tm, N // tn, K // tk),
        in_specs=[pl.BlockSpec((tm, tk), lambda i, j, k: (i, k)),
                  pl.BlockSpec((tk, tn), lambda i, j, k: (k, j)),
                  pl.BlockSpec((1, tn), lambda i, j, k: (0, j))],
        out_specs=pl.BlockSpec((tm, tn), lambda i, j, k: (i, j)),
        out_shape=jax.ShapeDtypeStruct((M, N), jnp.bfloat16),
        scratch_shapes=[pltpu.VMEM((tm, tn), jnp.float32)],
        compiler_params=pltpu.CompilerParams(
            dimension_semantics=("parallel", "parallel", "arbitrary")),
        cost_estimate=ce,
    )(x2d, w, b.reshape(1, N))


def dense_add_layernorm(x2d, w, b, res2d, gamma, beta):
    """LayerNorm((x @ w + b) + residual) fused in one kernel; bf16 in/out."""
    M, K = x2d.shape
    _, N = w.shape
    tm, tk = _pick_tile(M, _TM), _pick_tile(K, _TK)
    ce = pl.CostEstimate(
        flops=2 * M * N * K,
        transcendentals=0,
        bytes_accessed=2 * (M * K + K * N + 2 * M * N) + 12 * N)
    return pl.pallas_call(
        _matmul_bias_add_ln_kernel,
        grid=(M // tm, K // tk),
        in_specs=[pl.BlockSpec((tm, tk), lambda i, k: (i, k)),
                  pl.BlockSpec((tk, N), lambda i, k: (k, 0)),
                  pl.BlockSpec((1, N), lambda i, k: (0, 0)),
                  pl.BlockSpec((tm, N), lambda i, k: (i, 0)),
                  pl.BlockSpec((1, N), lambda i, k: (0, 0)),
                  pl.BlockSpec((1, N), lambda i, k: (0, 0))],
        out_specs=pl.BlockSpec((tm, N), lambda i, k: (i, 0)),
        out_shape=jax.ShapeDtypeStruct((M, N), jnp.bfloat16),
        scratch_shapes=[pltpu.VMEM((tm, N), jnp.float32)],
        compiler_params=pltpu.CompilerParams(
            dimension_semantics=("parallel", "arbitrary")),
        cost_estimate=ce,
    )(x2d, w, b.reshape(1, N), res2d, gamma.reshape(1, N), beta.reshape(1, N))


def embed_layernorm(word_e, pos_e, type_row, gamma, beta):
    """LayerNorm(word_e + pos_e + type_row) fused; returns (B, S, H) bf16."""
    B, S, H = word_e.shape
    ts = _pick_tile(S, _TM)
    return pl.pallas_call(
        _emb_add_ln_kernel,
        grid=(B, S // ts),
        in_specs=[pl.BlockSpec((1, ts, H), lambda b, s: (b, s, 0)),
                  pl.BlockSpec((ts, H), lambda b, s: (s, 0)),
                  pl.BlockSpec((1, H), lambda b, s: (0, 0)),
                  pl.BlockSpec((1, H), lambda b, s: (0, 0)),
                  pl.BlockSpec((1, H), lambda b, s: (0, 0))],
        out_specs=pl.BlockSpec((1, ts, H), lambda b, s: (b, s, 0)),
        out_shape=jax.ShapeDtypeStruct((B, S, H), jnp.bfloat16),
        compiler_params=pltpu.CompilerParams(
            dimension_semantics=("parallel", "parallel")),
    )(word_e, pos_e, type_row, gamma.reshape(1, H), beta.reshape(1, H))


def attention(qkv_bsh, add_mask, *, heads):
    """qkv_bsh: (B, S, 3H) bf16; add_mask: (B, 1, S) additive. Returns (B,S,H) bf16."""
    B, S, H3 = qkv_bsh.shape
    H = H3 // 3
    Dh = H // heads
    scale = 1.0 / math.sqrt(Dh)
    kern = functools.partial(_attn_kernel, heads=heads, scale=scale)
    # TODO(synk): for very long sequences, add a q-tile grid axis (flash-style
    # online softmax) instead of holding the full (S, S) score block; for BERT
    # lengths (S <= 512) the single-read-of-qkv design below is mem-optimal.
    return pl.pallas_call(
        kern,
        grid=(B,),
        in_specs=[pl.BlockSpec((1, S, H3), lambda b: (b, 0, 0)),
                  pl.BlockSpec((1, 1, S), lambda b: (b, 0, 0))],
        out_specs=pl.BlockSpec((1, S, H), lambda b: (b, 0, 0)),
        out_shape=jax.ShapeDtypeStruct((B, S, H), jnp.bfloat16),
        compiler_params=pltpu.CompilerParams(dimension_semantics=("parallel",)),
    )(qkv_bsh, add_mask)


# --------------------------- parameter construction ------------------------- #

def init_bert_params(key, *, vocab, max_pos, hidden, heads, inter, layers):
    std = 0.02

    def normal(k, shape, dtype=jnp.float32):
        return (std * jax.random.normal(k, shape, dtype=jnp.float32)).astype(dtype)

    keys = jax.random.split(key, 3 + layers)
    params = {
        "word_emb": normal(keys[0], (vocab, hidden)),
        "pos_emb": normal(keys[1], (max_pos, hidden)),
        "type_emb": normal(keys[2], (2, hidden)),
        "emb_ln_g": jnp.ones((hidden,), jnp.float32),
        "emb_ln_b": jnp.zeros((hidden,), jnp.float32),
        "layers": [],
    }
    for li in range(layers):
        lk = jax.random.split(keys[3 + li], 4)
        params["layers"].append({
            # packed QKV projection: one (H, 3H) weight, bf16 for the MXU
            "wqkv": normal(lk[0], (hidden, 3 * hidden), jnp.bfloat16),
            "bqkv": jnp.zeros((3 * hidden,), jnp.float32),
            "wo": normal(lk[1], (hidden, hidden), jnp.bfloat16),
            "bo": jnp.zeros((hidden,), jnp.float32),
            "ln1_g": jnp.ones((hidden,), jnp.float32),
            "ln1_b": jnp.zeros((hidden,), jnp.float32),
            "wi": normal(lk[2], (hidden, inter), jnp.bfloat16),
            "bi": jnp.zeros((inter,), jnp.float32),
            "wo2": normal(lk[3], (inter, hidden), jnp.bfloat16),
            "bo2": jnp.zeros((hidden,), jnp.float32),
            "ln2_g": jnp.ones((hidden,), jnp.float32),
            "ln2_b": jnp.zeros((hidden,), jnp.float32),
        })
    return params


# -------------------------------- forward pass ------------------------------ #

def bert_base_layer_forward(params, words, mask, *, heads):
    """Equivalent of BERTBaseLayer.forward: returns last_hidden_state (B, S, H)."""
    B, S = words.shape
    H = params["word_emb"].shape[1]

    # --- embeddings: gather is glue in plain JAX; add + LN fused in-kernel ---
    word_e = jnp.take(params["word_emb"], words, axis=0)        # (B, S, H) f32
    pos_e = params["pos_emb"][:S]                               # (S, H)
    type_row = params["type_emb"][0:1]                          # token_type_ids = 0

    h = embed_layernorm(word_e, pos_e, type_row,
                        params["emb_ln_g"], params["emb_ln_b"])  # (B, S, H) bf16
    h = h.reshape(B * S, H)

    # additive row mask (0 keep / -10000 masked); never materialized as (B,1,S,S)
    add_mask = ((1.0 - mask.astype(jnp.float32)) * -10000.0).reshape(B, 1, S)

    for lp in params["layers"]:
        # fused QKV projection: (B*S, H) @ (H, 3H)
        qkv = dense(h, lp["wqkv"], lp["bqkv"])                  # (B*S, 3H) bf16
        ctx = attention(qkv.reshape(B, S, 3 * H), add_mask, heads=heads)
        ctx = ctx.reshape(B * S, H)                             # bf16, lane-dense
        # attention output dense fused with residual-add + LayerNorm1
        h = dense_add_layernorm(ctx, lp["wo"], lp["bo"], h,
                                lp["ln1_g"], lp["ln1_b"])
        # feed-forward: GELU intermediate, then output dense fused with LN2
        inter = dense(h, lp["wi"], lp["bi"], activation="gelu")
        h = dense_add_layernorm(inter, lp["wo2"], lp["bo2"], h,
                                lp["ln2_g"], lp["ln2_b"])

    return h.reshape(B, S, H).astype(jnp.float32)


# ----------------------------------- main ----------------------------------- #

if __name__ == "__main__":
    B, S = 2, 8
    HIDDEN, HEADS, INTER, LAYERS = 32, 2, 128, 2
    VOCAB, MAX_POS = 64, 64

    key = jax.random.PRNGKey(0)
    pkey, wkey = jax.random.split(key)
    params = init_bert_params(pkey, vocab=VOCAB, max_pos=MAX_POS,
                              hidden=HIDDEN, heads=HEADS, inter=INTER,
                              layers=LAYERS)

    words = jax.random.randint(wkey, (B, S), 0, VOCAB, dtype=jnp.int32)
    mask = jnp.array([[1] * S, [1] * (S - 2) + [0] * 2], dtype=jnp.int32)

    out = bert_base_layer_forward(params, words, mask, heads=HEADS)
    out = jax.block_until_ready(out)
    assert out.shape == (B, S, HIDDEN)
    assert bool(jnp.all(jnp.isfinite(out)))
    print("KERNEL_OK")
</pallas_src>

<mosaic_0001>
module attributes {stable_mosaic.version = 11 : i64} {
  func.func @_emb_add_ln_kernel(%arg0: i32, %arg1: i32, %arg2: memref<1x8x32xf32, #tpu.memory_space<vmem>>, %arg3: memref<8x32xf32, #tpu.memory_space<vmem>>, %arg4: memref<1x32xf32, #tpu.memory_space<vmem>>, %arg5: memref<1x32xf32, #tpu.memory_space<vmem>>, %arg6: memref<1x32xf32, #tpu.memory_space<vmem>>, %arg7: memref<1x8x32xbf16, #tpu.memory_space<vmem>>) attributes {dimension_semantics = [#tpu.dimension_semantics<parallel>, #tpu.dimension_semantics<parallel>], iteration_bounds = array<i64: 2, 1>, scalar_prefetch = 0 : i64, scratch_operands = 0 : i64, tpu.core_type = #tpu.core_type<tc>, window_params = [{transform_indices = @transform_0, window_bounds = array<i64: 1, 8, 32>}, {transform_indices = @transform_1, window_bounds = array<i64: 8, 32>}, {pipeline_mode = #tpu.pipeline_mode<synchronous>, transform_indices = @transform_2, window_bounds = array<i64: 1, 32>}, {pipeline_mode = #tpu.pipeline_mode<synchronous>, transform_indices = @transform_3, window_bounds = array<i64: 1, 32>}, {pipeline_mode = #tpu.pipeline_mode<synchronous>, transform_indices = @transform_4, window_bounds = array<i64: 1, 32>}, {transform_indices = @transform_5, window_bounds = array<i64: 1, 8, 32>}]} {
    %c0 = arith.constant 0 : index
    %c0_0 = arith.constant 0 : index
    %c0_1 = arith.constant 0 : index
    %0 = vector.load %arg2[%c0, %c0_0, %c0_1] : memref<1x8x32xf32, #tpu.memory_space<vmem>>, vector<1x8x32xf32>
    %1 = vector.shape_cast %0 : vector<1x8x32xf32> to vector<8x32xf32>
    %c0_2 = arith.constant 0 : index
    %c0_3 = arith.constant 0 : index
    %2 = vector.load %arg3[%c0_2, %c0_3] : memref<8x32xf32, #tpu.memory_space<vmem>>, vector<8x32xf32>
    %3 = arith.addf %1, %2 : vector<8x32xf32>
    %c0_4 = arith.constant 0 : index
    %c0_5 = arith.constant 0 : index
    %4 = vector.load %arg4[%c0_4, %c0_5] : memref<1x32xf32, #tpu.memory_space<vmem>>, vector<1x32xf32>
    %5 = vector.broadcast %4 : vector<1x32xf32> to vector<8x32xf32>
    %6 = arith.addf %3, %5 : vector<8x32xf32>
    %cst = arith.constant dense<0.000000e+00> : vector<8xf32>
    %7 = vector.multi_reduction <add>, %6, %cst [1] : vector<8x32xf32> to vector<8xf32>
    %8 = vector.shape_cast %7 : vector<8xf32> to vector<8x1xf32>
    %cst_6 = arith.constant 3.200000e+01 : f32
    %9 = vector.broadcast %cst_6 : f32 to vector<8x1xf32>
    %10 = arith.divf %8, %9 : vector<8x1xf32>
    %11 = vector.broadcast %10 : vector<8x1xf32> to vector<8x32xf32>
    %12 = arith.subf %6, %11 : vector<8x32xf32>
    %13 = arith.mulf %12, %12 : vector<8x32xf32>
    %cst_7 = arith.constant dense<0.000000e+00> : vector<8xf32>
    %14 = vector.multi_reduction <add>, %13, %cst_7 [1] : vector<8x32xf32> to vector<8xf32>
    %15 = vector.shape_cast %14 : vector<8xf32> to vector<8x1xf32>
    %cst_8 = arith.constant 3.200000e+01 : f32
    %16 = vector.broadcast %cst_8 : f32 to vector<8x1xf32>
    %17 = arith.divf %15, %16 : vector<8x1xf32>
    %18 = vector.broadcast %10 : vector<8x1xf32> to vector<8x32xf32>
    %19 = arith.subf %6, %18 : vector<8x32xf32>
    %cst_9 = arith.constant 9.99999996E-13 : f32
    %20 = vector.broadcast %cst_9 : f32 to vector<8x1xf32>
    %21 = arith.addf %17, %20 : vector<8x1xf32>
    %22 = math.rsqrt %21 : vector<8x1xf32>
    %23 = vector.broadcast %22 : vector<8x1xf32> to vector<8x32xf32>
    %24 = arith.mulf %19, %23 : vector<8x32xf32>
    %c0_10 = arith.constant 0 : index
    %c0_11 = arith.constant 0 : index
    %25 = vector.load %arg5[%c0_10, %c0_11] : memref<1x32xf32, #tpu.memory_space<vmem>>, vector<1x32xf32>
    %26 = vector.broadcast %25 : vector<1x32xf32> to vector<8x32xf32>
    %27 = arith.mulf %24, %26 : vector<8x32xf32>
    %c0_12 = arith.constant 0 : index
    %c0_13 = arith.constant 0 : index
    %28 = vector.load %arg6[%c0_12, %c0_13] : memref<1x32xf32, #tpu.memory_space<vmem>>, vector<1x32xf32>
    %29 = vector.broadcast %28 : vector<1x32xf32> to vector<8x32xf32>
    %30 = arith.addf %27, %29 : vector<8x32xf32>
    %31 = arith.truncf %30 : vector<8x32xf32> to vector<8x32xbf16>
    %c0_14 = arith.constant 0 : index
    %c0_15 = arith.constant 0 : index
    %c0_16 = arith.constant 0 : index
    %32 = vector.load %arg7[%c0_14, %c0_15, %c0_16] : memref<1x8x32xbf16, #tpu.memory_space<vmem>>, vector<1x8x32xbf16>
    %33 = vector.shape_cast %32 : vector<1x8x32xbf16> to vector<8x32xbf16>
    %34 = vector.shape_cast %31 : vector<8x32xbf16> to vector<1x8x32xbf16>
    tpu.vector_store %arg7[%c0_14, %c0_15, %c0_16], %34 {strides = array<i32>} : memref<1x8x32xbf16, #tpu.memory_space<vmem>>, vector<1x8x32xbf16>,
    return
  }
  func.func @transform_0(%arg0: i32, %arg1: i32) -> (i32, i32, i32) {
    %c0_i32 = arith.constant 0 : i32
    %c0_i32_0 = arith.constant 0 : i32
    return %arg0, %arg1, %c0_i32 : i32, i32, i32
  }
  func.func @transform_1(%arg0: i32, %arg1: i32) -> (i32, i32) {
    %c0_i32 = arith.constant 0 : i32
    %c0_i32_0 = arith.constant 0 : i32
    return %arg1, %c0_i32 : i32, i32
  }
  func.func @transform_2(%arg0: i32, %arg1: i32) -> (i32, i32) {
    %c0_i32 = arith.constant 0 : i32
    %c0_i32_0 = arith.constant 0 : i32
    %c0_i32_1 = arith.constant 0 : i32
    return %c0_i32, %c0_i32_0 : i32, i32
  }
  func.func @transform_3(%arg0: i32, %arg1: i32) -> (i32, i32) {
    %c0_i32 = arith.constant 0 : i32
    %c0_i32_0 = arith.constant 0 : i32
    %c0_i32_1 = arith.constant 0 : i32
    return %c0_i32, %c0_i32_0 : i32, i32
  }
  func.func @transform_4(%arg0: i32, %arg1: i32) -> (i32, i32) {
    %c0_i32 = arith.constant 0 : i32
    %c0_i32_0 = arith.constant 0 : i32
    %c0_i32_1 = arith.constant 0 : i32
    return %c0_i32, %c0_i32_0 : i32, i32
  }
  func.func @transform_5(%arg0: i32, %arg1: i32) -> (i32, i32, i32) {
    %c0_i32 = arith.constant 0 : i32
    %c0_i32_0 = arith.constant 0 : i32
    return %arg0, %arg1, %c0_i32 : i32, i32, i32
  }
}

</mosaic_0001>

<llo_original>
// kernel: tpu_custom_call.1
$region0: #{tpu_custom_call.1}
  #allocation0 [shape = 'u32[]', space=smem, size = 0x4, offset = 0x4, fixed_abs, tag = 'smem constant byte address 0x4 - core index']
  #allocation1 [shape = 'u32[144,128]{1,0:T(1,128)}', space=vmem, size = 0x12000, scoped, tag = 'internal scratch']
  %s0 = inlined_call_operand.hbm [shape: f32[2,8,32], index: 0, kind: input, shape index: {}]
  %s1 = inlined_call_operand.hbm [shape: f32[8,32], index: 1, kind: input, shape index: {}]
  %s2 = inlined_call_operand.vmem [shape: f32[1,32], index: 2, kind: input, shape index: {}]
  %s3 = inlined_call_operand.vmem [shape: f32[1,32], index: 3, kind: input, shape index: {}]
  %s4 = inlined_call_operand.vmem [shape: f32[1,32], index: 4, kind: input, shape index: {}]
  %s5 = inlined_call_operand.hbm [shape: bf16[2,8,32], index: 5, kind: output, shape index: {}]
  %s6 = sld [smem:[#allocation0]]
  $region61: #{tpu_custom_call.1} parent=0
    _
  %s8 = ssub.s32 1, %s6
  %s9 = scalar_select 0, %s8, %s6
  $region1: #{tpu_custom_call.1} parent=0
    #allocation2 [shape = 'u8[8192]{0}', space=vmem, size = 0x2000, scoped, tag = 'input window, operand 0']
    #allocation3 [shape = 's32[2]{0}', space=sflag, size = 0x8, scoped, tag = 'scoped memory for tpu_custom_call.1']
    #allocation4 [shape = 's32[2]{0}', space=sflag, size = 0x8, scoped, tag = 'scoped memory for tpu_custom_call.1']
    #allocation5 [shape = 'u8[4096]{0}', space=vmem, size = 0x1000, scoped, tag = 'input window, operand 1, single buffered']
    #allocation6 [shape = 's32[1]{0}', space=sflag, size = 0x4, scoped, tag = 'scoped memory for tpu_custom_call.1']
    #allocation7 [shape = 'u8[4096]{0}', space=vmem, size = 0x1000, scoped, tag = 'output window, operand 0']
    %10 = vsyncpa [#allocation3], 0
    %s11 = scalar_lea.sflag [#allocation3], 1
    %12 = vsyncpa %s11, 0
    %13 = vsyncpa [#allocation6], 0
    %14 = vsyncpa [#allocation4], 0
    %s15 = scalar_lea.sflag [#allocation4], 1
    %16 = vsyncpa %s15, 0
    loop: start=0, step=1, limit=4
    $region2: #{tpu_custom_call.1} parent=1 // loop_pre_header
      _
    $region3: #{tpu_custom_call.1} parent=1 // loop_header
      %s18 = sphi 0, %s22
      %p19 = scmp.ge.s32.totalorder %s18, 4
      %s25 = sphi 0, %s37
      %s26 = sphi 0, %s33
      %s27 = sphi 0, %s25
      %s28 = sphi 0, %s26
      %s29 = sphi 0, %s27
      %s30 = sphi 0, %s28
      %s42 = sphi 0, %s44
      %s45 = sphi 0, %s42
      %s46 = sphi 0, %s45
      %s62 = sphi 0, %s46
      %s68 = sphi 0, %s70
      %s71 = sphi 0, %s68
      %s72 = sphi 0, %s71
      %s88 = sphi 0, %s72
      %s92 = sphi 0, %s92
      %s94 = sphi 0, %s92
      %s95 = sphi 0, %s94
      %s109 = sphi 0, %s95
      %s113 = sphi 0, %s113
      %s115 = sphi 0, %s113
      %s116 = sphi 0, %s115
      %s130 = sphi 0, %s116
      %s134 = sphi 0, %s134
      %s136 = sphi 0, %s134
      %s137 = sphi 0, %s136
      %s151 = sphi 0, %s137
      %s159 = sphi 0, %s161
      %s162 = sphi 0, %s159
      %s163 = sphi 0, %s162
      %s179 = sphi 0, %s163
    $region4: #{tpu_custom_call.1} parent=1 // loop_header_branch
      %21 = sbr.rel (%p19) target = $region8
    $region5: #{tpu_custom_call.1} parent=1 // loop_body
      %s23 = ssub.s32 %s18, 1
      %s24 = ssub.s32 %s18, 2
      %s31 = sadd.s32 1, %s26
      %p32 = scmp.ge.s32.totalorder %s31, 1
      %s33 = scalar_select %p32, 0, %s31
      %s34 = sadd.s32 1, %s25
      %s35 = scalar_select %p32, %s34, %s25
      %p36 = scmp.ge.s32.totalorder %s35, 2
      %s37 = scalar_select %p36, 0, %s35
      %s38 = ssub.s32 %s25, %s37
      %s39 = ssub.s32 %s26, %s33
      %s40 = sor.u32 %s38, %s39
      %p41 = scmp.eq.s32.totalorder %s40, 0
      %s43 = sadd.s32 %s42, 1
      %s44 = scalar_select %p41, %s42, %s43
      %p47 = pneg %p41
      %p48 = scmp.eq.s32.totalorder %s18, 1
      %p49 = por %p47, %p48
      %p50 = scmp.ne.s32.totalorder %s42, %s45
      %p51 = scmp.eq.s32.totalorder %s18, 0
      %p52 = por %p50, %p51
      %p53 = scmp.ne.s32.totalorder %s42, %s45
      %p54 = scmp.eq.s32.totalorder %s23, 1
      %p55 = por %p53, %p54
      %p56 = scmp.ne.s32.totalorder %s45, %s46
      %p57 = scmp.eq.s32.totalorder %s23, 0
      %p58 = por %p56, %p57
      %p59 = scmp.ne.s32.totalorder %s45, %s46
      %p60 = scmp.eq.s32.totalorder %s24, 1
      %p61 = por %p59, %p60
      %p63 = scmp.ne.s32.totalorder %s46, %s62
      %p64 = scmp.eq.s32.totalorder %s24, 0
      %p65 = por %p63, %p64
      %s66 = ssub.s32 %s26, %s33
      %p67 = scmp.eq.s32.totalorder %s66, 0
      %s69 = sadd.s32 %s68, 1
      %s70 = scalar_select %p67, %s68, %s69
      %p73 = pneg %p67
      %p74 = scmp.eq.s32.totalorder %s18, 1
      %p75 = por %p73, %p74
      %p76 = scmp.ne.s32.totalorder %s68, %s71
      %p77 = scmp.eq.s32.totalorder %s18, 0
      %p78 = por %p76, %p77
      %p79 = scmp.ne.s32.totalorder %s68, %s71
      %p80 = scmp.eq.s32.totalorder %s23, 1
      %p81 = por %p79, %p80
      %p82 = scmp.ne.s32.totalorder %s71, %s72
      %p83 = scmp.eq.s32.totalorder %s23, 0
      %p84 = por %p82, %p83
      %p85 = scmp.ne.s32.totalorder %s71, %s72
      %p86 = scmp.eq.s32.totalorder %s24, 1
      %p87 = por %p85, %p86
      %p89 = scmp.ne.s32.totalorder %s72, %s88
      %p90 = scmp.eq.s32.totalorder %s24, 0
      %p91 = por %p89, %p90
      %s93 = sadd.s32 %s92, 1
      %p96 = scmp.eq.s32.totalorder %s18, 1
      %p97 = scmp.ne.s32.totalorder %s92, %s94
      %p98 = scmp.eq.s32.totalorder %s18, 0
      %p99 = por %p97, %p98
      %p100 = scmp.ne.s32.totalorder %s92, %s94
      %p101 = scmp.eq.s32.totalorder %s23, 1
      %p102 = por %p100, %p101
      %p103 = scmp.ne.s32.totalorder %s94, %s95
      %p104 = scmp.eq.s32.totalorder %s23, 0
      %p105 = por %p103, %p104
      %p106 = scmp.ne.s32.totalorder %s94, %s95
      %p107 = scmp.eq.s32.totalorder %s24, 1
      %p108 = por %p106, %p107
      %p110 = scmp.ne.s32.totalorder %s95, %s109
      %p111 = scmp.eq.s32.totalorder %s24, 0
      %p112 = por %p110, %p111
      %s114 = sadd.s32 %s113, 1
      %p117 = scmp.eq.s32.totalorder %s18, 1
      %p118 = scmp.ne.s32.totalorder %s113, %s115
      %p119 = scmp.eq.s32.totalorder %s18, 0
      %p120 = por %p118, %p119
      %p121 = scmp.ne.s32.totalorder %s113, %s115
      %p122 = scmp.eq.s32.totalorder %s23, 1
      %p123 = por %p121, %p122
      %p124 = scmp.ne.s32.totalorder %s115, %s116
      %p125 = scmp.eq.s32.totalorder %s23, 0
      %p126 = por %p124, %p125
      %p127 = scmp.ne.s32.totalorder %s115, %s116
      %p128 = scmp.eq.s32.totalorder %s24, 1
      %p129 = por %p127, %p128
      %p131 = scmp.ne.s32.totalorder %s116, %s130
      %p132 = scmp.eq.s32.totalorder %s24, 0
      %p133 = por %p131, %p132
      %s135 = sadd.s32 %s134, 1
      %p138 = scmp.eq.s32.totalorder %s18, 1
      %p139 = scmp.ne.s32.totalorder %s134, %s136
      %p140 = scmp.eq.s32.totalorder %s18, 0
      %p141 = por %p139, %p140
      %p142 = scmp.ne.s32.totalorder %s134, %s136
      %p143 = scmp.eq.s32.totalorder %s23, 1
      %p144 = por %p142, %p143
      %p145 = scmp.ne.s32.totalorder %s136, %s137
      %p146 = scmp.eq.s32.totalorder %s23, 0
      %p147 = por %p145, %p146
      %p148 = scmp.ne.s32.totalorder %s136, %s137
      %p149 = scmp.eq.s32.totalorder %s24, 1
      %p150 = por %p148, %p149
      %p152 = scmp.ne.s32.totalorder %s137, %s151
      %p153 = scmp.eq.s32.totalorder %s24, 0
      %p154 = por %p152, %p153
      %s155 = ssub.s32 %s25, %s37
      %s156 = ssub.s32 %s26, %s33
      %s157 = sor.u32 %s155, %s156
      %p158 = scmp.eq.s32.totalorder %s157, 0
      %s160 = sadd.s32 %s159, 1
      %s161 = scalar_select %p158, %s159, %s160
      %p164 = pneg %p158
      %p165 = scmp.eq.s32.totalorder %s18, 1
      %p166 = por %p164, %p165
      %p167 = scmp.ne.s32.totalorder %s159, %s162
      %p168 = scmp.eq.s32.totalorder %s18, 0
      %p169 = por %p167, %p168
      %p170 = scmp.ne.s32.totalorder %s159, %s162
      %p171 = scmp.eq.s32.totalorder %s23, 1
      %p172 = por %p170, %p171
      %p173 = scmp.ne.s32.totalorder %s162, %s163
      %p174 = scmp.eq.s32.totalorder %s23, 0
      %p175 = por %p173, %p174
      %p176 = scmp.ne.s32.totalorder %s162, %s163
      %p177 = scmp.eq.s32.totalorder %s24, 1
      %p178 = por %p176, %p177
      %p180 = scmp.ne.s32.totalorder %s163, %s179
      %p181 = scmp.eq.s32.totalorder %s24, 0
      %p182 = por %p180, %p181
      %p183 = scmp.le.s32.totalorder 1, %s18
      %p184 = scmp.lt.s32.totalorder %s18, 3
      %p185 = pnand %p183, %p184
      %p186 = pneg %p185
      // Predicated region
      $region9: #{tpu_custom_call.1} parent=5 // pred_check
        _
      $region10: #{tpu_custom_call.1} parent=5 // pred_check_branch
        %188 = sbr.rel (%p185) target = $region12
      $region11: #{tpu_custom_call.1} parent=5 // pred_region
        %s189 = ssub.s32 %s18, 1
        // Predicated region
        $region13: #{tpu_custom_call.1} parent=11 // pred_check
          %p190 = pneg %p84
        $region14: #{tpu_custom_call.1} parent=11 // pred_check_branch
          %192 = sbr.rel (%p190) target = $region16
        $region15: #{tpu_custom_call.1} parent=11 // pred_region
          %s194 = ssub.s32 128, 128
          %195 = vsyncadd [#allocation6], %s194
          %s196 = smul.addr %s28, 128
          %s197 = scalar_lea.hbm %s1, %s196
          %s199 = sshll.u32 [#allocation5], 4
          %s200 = int_to_ptr.vmem [resolvable:$true] %s199
          %202 = dma.hbm_to_vmem [thread:$0]  %s197, 128, %s200, [#allocation6]
        $region16: #{tpu_custom_call.1} parent=11 // pred_fallthru
          _
        // Predicated region
        $region17: #{tpu_custom_call.1} parent=11 // pred_check
          %p203 = pneg %p105
        $region18: #{tpu_custom_call.1} parent=11 // pred_check_branch
          %205 = sbr.rel (%p203) target = $region20
        $region19: #{tpu_custom_call.1} parent=11 // pred_region
          _
        $region20: #{tpu_custom_call.1} parent=11 // pred_fallthru
          _
        // Predicated region
        $region21: #{tpu_custom_call.1} parent=11 // pred_check
          %p206 = pneg %p126
        $region22: #{tpu_custom_call.1} parent=11 // pred_check_branch
          %208 = sbr.rel (%p206) target = $region24
        $region23: #{tpu_custom_call.1} parent=11 // pred_region
          _
        $region24: #{tpu_custom_call.1} parent=11 // pred_fallthru
          _
        // Predicated region
        $region25: #{tpu_custom_call.1} parent=11 // pred_check
          %p209 = pneg %p147
        $region26: #{tpu_custom_call.1} parent=11 // pred_check_branch
          %211 = sbr.rel (%p209) target = $region28
        $region27: #{tpu_custom_call.1} parent=11 // pred_region
          _
        $region28: #{tpu_custom_call.1} parent=11 // pred_fallthru
          _
      $region12: #{tpu_custom_call.1} parent=5 // pred_fallthru
        _
      %p212 = scmp.lt.s32.totalorder %s18, 2
      // Predicated region
      $region29: #{tpu_custom_call.1} parent=5 // pred_check
        %p213 = pneg %p212
      $region30: #{tpu_custom_call.1} parent=5 // pred_check_branch
        %215 = sbr.rel (%p213) target = $region32
      $region31: #{tpu_custom_call.1} parent=5 // pred_region
        // Predicated region
        $region33: #{tpu_custom_call.1} parent=31 // pred_check
          %p216 = pneg %p52
        $region34: #{tpu_custom_call.1} parent=31 // pred_check_branch
          %218 = sbr.rel (%p216) target = $region36
        $region35: #{tpu_custom_call.1} parent=31 // pred_region
          %s219 = sand.u32 %s42, 1
          %s220 = scalar_lea.sflag [#allocation3], %s219
          %s221 = sand.u32 %s42, 1
          %s222 = smul.addr %s221, 8
          %s223 = scalar_lea.vmem [#allocation2], %s222
          %s225 = ssub.s32 128, 128
          %226 = vsyncadd %s220, %s225
          %s227 = sadd.s32 %s26, %s25
          %s228 = smul.addr %s227, 128
          %s229 = scalar_lea.hbm %s0, %s228
          %s231 = sshll.u32 %s223, 4
          %s232 = int_to_ptr.vmem [resolvable:$true] %s231
          %234 = dma.hbm_to_vmem [thread:$0]  %s229, 128, %s232, %s220
        $region36: #{tpu_custom_call.1} parent=31 // pred_fallthru
          _
      $region32: #{tpu_custom_call.1} parent=5 // pred_fallthru
        _
      %p235 = scmp.le.s32.totalorder 1, %s18
      %p236 = scmp.lt.s32.totalorder %s18, 3
      %p237 = pnand %p235, %p236
      %p238 = pneg %p237
      // Predicated region
      $region37: #{tpu_custom_call.1} parent=5 // pred_check
        _
      $region38: #{tpu_custom_call.1} parent=5 // pred_check_branch
        %240 = sbr.rel (%p237) target = $region40
      $region39: #{tpu_custom_call.1} parent=5 // pred_region
        %s241 = ssub.s32 %s18, 1
        %s242 = sand.u32 %s45, 1
        %s243 = scalar_lea.sflag [#allocation3], %s242
        %s244 = sand.u32 %s45, 1
        %s245 = smul.addr %s244, 8
        %s246 = scalar_lea.vmem [#allocation2], %s245
        // Predicated region
        $region41: #{tpu_custom_call.1} parent=39 // pred_check
          %p247 = pneg %p58
        $region42: #{tpu_custom_call.1} parent=39 // pred_check_branch
          %249 = sbr.rel (%p247) target = $region44
        $region43: #{tpu_custom_call.1} parent=39 // pred_region
          %250 = dma.done %s243, 128
        $region44: #{tpu_custom_call.1} parent=39 // pred_fallthru
          _
        // Predicated region
        $region45: #{tpu_custom_call.1} parent=39 // pred_check
          %p251 = pneg %p84
        $region46: #{tpu_custom_call.1} parent=39 // pred_check_branch
          %253 = sbr.rel (%p251) target = $region48
        $region47: #{tpu_custom_call.1} parent=39 // pred_region
          %254 = dma.done [#allocation6], 128
        $region48: #{tpu_custom_call.1} parent=39 // pred_fallthru
          _
        %s255 = sand.u32 %s45, 1
        %s256 = scalar_lea.sflag [#allocation3], %s255
        %s257 = sand.u32 %s45, 1
        %s258 = smul.addr %s257, 8
        %s259 = scalar_lea.vmem [#allocation2], %s258
        %p260 = pneg %p58
        %p261 = pneg %p55
        %p262 = pneg %p84
        %p263 = pneg %p81
        %p264 = pneg %p105
        %p265 = pneg %p102
        %p266 = pneg %p126
        %p267 = pneg %p123
        %p268 = pneg %p147
        %p269 = pneg %p144
        %p270 = pneg %p175
        %p271 = pneg %p172
        %s272 = sand.u32 %s162, 1
        %s273 = scalar_lea.sflag [#allocation4], %s272
        %s274 = sand.u32 %s162, 1
        %s275 = smul.addr %s274, 4
        %s276 = scalar_lea.vmem [#allocation7], %s275
        %v277 = vld [vmem:[%s246] sm:$0xff]
        %v278 = vld [vmem:[#allocation5] sm:$0xff]
        %v279 = vadd.f32 %v277, %v278
        %v280 = vld [vmem:[%s2] sm:$0x1]
        %v282 = vlaneseq
        %v283 = vshrl.u32 %v282, 7
        %v284 = vsub.s32 0, %v283
        %v285 = vrot.slane %v280, %v284
        %v287 = vadd.f32 %v279, %v285
        %vm288 = vcmask 261120
        %v289 = vsel %vm288, %v287, 0.0
        %290 = vadd.xlane.f32.xlu0 %v289
        %v291 = vpop.xlane.xlu0 %290
        %v292 = vrcp.pop 32.0
        %v293 = vmul.f32 %v291, %v292
        %v294 = vsub.f32 %v287, %v293
        %v295 = vmul.f32 %v294, %v294
        %v296 = vsel %vm288, %v295, 0.0
        %297 = vadd.xlane.f32.xlu0 %v296
        %v298 = vpop.xlane.xlu0 %297
        %v299 = vmul.f32 %v298, %v292
        %v300 = vadd.f32 %v299, 1e-12
        %v301 = vrsqrt.pop %v300
        %v302 = vmul.f32 %v294, %v301
        %v303 = vld [vmem:[%s3] sm:$0x1]
        %v305 = vlaneseq
        %v306 = vshrl.u32 %v305, 7
        %v307 = vsub.s32 0, %v306
        %v308 = vrot.slane %v303, %v307
        %v310 = vmul.f32 %v302, %v308
        %v311 = vld [vmem:[%s4] sm:$0x1]
        %v313 = vlaneseq
        %v314 = vshrl.u32 %v313, 7
        %v315 = vsub.s32 0, %v314
        %v316 = vrot.slane %v311, %v315
        %v318 = vadd.f32 %v310, %v316
        %v319 = vpack.c.bf16 %v318, %v318
        %vm320 = vcmask 257024
        %321 = vst.msk [vmem:[%s276] sm:$0xf] %vm320, %v319
        %s322 = sand.u32 %s162, 1
        %s323 = scalar_lea.sflag [#allocation4], %s322
        %s324 = sand.u32 %s162, 1
        %s325 = smul.addr %s324, 4
        %s326 = scalar_lea.vmem [#allocation7], %s325
        // Predicated region
        $region49: #{tpu_custom_call.1} parent=39 // pred_check
          %p327 = pneg %p172
        $region50: #{tpu_custom_call.1} parent=39 // pred_check_branch
          %329 = sbr.rel (%p327) target = $region52
        $region51: #{tpu_custom_call.1} parent=39 // pred_region
          %s331 = ssub.s32 64, 64
          %332 = vsyncadd %s323, %s331
          %s333 = sadd.s32 %s28, %s27
          %s334 = smul.addr %s333, 64
          %s335 = scalar_lea.hbm %s5, %s334
          %s337 = sshll.u32 %s326, 4
          %s338 = int_to_ptr.vmem [resolvable:$true] %s337
          %340 = dma.vmem_to_hbm [thread:$0]  %s338, 64, %s335, %s323
        $region52: #{tpu_custom_call.1} parent=39 // pred_fallthru
          _
      $region40: #{tpu_custom_call.1} parent=5 // pred_fallthru
        _
      %p341 = scmp.le.s32.totalorder 2, %s18
      // Predicated region
      $region53: #{tpu_custom_call.1} parent=5 // pred_check
        %p342 = pneg %p341
      $region54: #{tpu_custom_call.1} parent=5 // pred_check_branch
        %344 = sbr.rel (%p342) target = $region56
      $region55: #{tpu_custom_call.1} parent=5 // pred_region
        %s345 = ssub.s32 %s18, 2
        // Predicated region
        $region57: #{tpu_custom_call.1} parent=55 // pred_check
          %p346 = pneg %p178
        $region58: #{tpu_custom_call.1} parent=55 // pred_check_branch
          %348 = sbr.rel (%p346) target = $region60
        $region59: #{tpu_custom_call.1} parent=55 // pred_region
          %s349 = sand.u32 %s163, 1
          %s350 = scalar_lea.sflag [#allocation4], %s349
          %s351 = sand.u32 %s163, 1
          %s352 = smul.addr %s351, 4
          %s353 = scalar_lea.vmem [#allocation7], %s352
          %354 = dma.done %s350, 64
        $region60: #{tpu_custom_call.1} parent=55 // pred_fallthru
          _
      $region56: #{tpu_custom_call.1} parent=5 // pred_fallthru
        _
    $region6: #{tpu_custom_call.1} parent=1 // loop_footer
      %s22 = sadd.s32 1, %s18
    $region7: #{tpu_custom_call.1} parent=1 // loop_footer_branch
      %17 = sbr.rel target = $region3
    $region8: #{tpu_custom_call.1} parent=1 // loop_exit
      _
    %355 = vsyncpa [#allocation3], 1
    %s356 = scalar_lea.sflag [#allocation3], 1
    %357 = vsyncpa %s356, 1
    %358 = vsyncpa [#allocation6], 1
    %359 = vsyncpa [#allocation4], 1
    %s360 = scalar_lea.sflag [#allocation4], 1
    %361 = vsyncpa %s360, 1

</llo_original>
